<compile_context>
chip_gen: v7x
topology: tpu7x:2x2x1
jax: 0.10.0
libtpu: 0.0.40
codegen_flags: <defaults>
</compile_context>

<pallas_src>
import functools

import jax
import jax.numpy as jnp
from jax.experimental import pallas as pl
from jax.experimental.pallas import tpu as pltpu


def _round_up(x, m):
    return (x + m - 1) // m * m


# ---------------------------------------------------------------------------
# Kernel: fused (word + pos/lang) add + LayerNorm over a (TB, H) token tile.
# ---------------------------------------------------------------------------
def _palm_ln_kernel(word_ref, poslang_ref, gamma_ref, beta_ref, out_ref, *, eps):
    x = (word_ref[...].astype(jnp.float32)
         + poslang_ref[...].astype(jnp.float32))                 # (TB, H)
    mean = jnp.mean(x, axis=-1, keepdims=True)
    centered = x - mean
    var = jnp.mean(centered * centered, axis=-1, keepdims=True)
    inv = jax.lax.rsqrt(var + eps)
    y = centered * inv
    out_ref[...] = (y * gamma_ref[...].astype(jnp.float32)
                    + beta_ref[...].astype(jnp.float32)).astype(out_ref.dtype)


def palm_embeddings(input_ids, word_table, pos_table, lang_table,
                    gamma, beta, *, fixed_source_length, eps=1e-12,
                    seq_tile=256):
    """Pallas implementation of PALMEmbeddings.forward (eval mode)."""
    if input_ids.ndim == 1:
        input_ids = input_ids[None, :]
    B, S = input_ids.shape
    H = word_table.shape[1]

    # position_ids / language_ids (same semantics as the torch code; S static)
    pos_ids = jnp.arange(S, dtype=jnp.int32)
    lang_ids_row = jnp.zeros((S,), dtype=jnp.int32)
    if S > fixed_source_length:
        pos_ids = pos_ids.at[fixed_source_length:].set(
            jnp.arange(S - fixed_source_length, dtype=jnp.int32))
        lang_ids_row = lang_ids_row.at[fixed_source_length:].set(1)

    # pos+lang embedding is static per position -> precompute once, (S, H).
    poslang = (jnp.take(pos_table, pos_ids, axis=0)
               + jnp.take(lang_table, lang_ids_row, axis=0)).astype(jnp.float32)

    # Sequence tiling: TB multiple of 8, capped (safe for v7x's smaller VMEM).
    TB = min(int(seq_tile), _round_up(S, 8))
    S_pad = _round_up(S, TB)
    if S_pad != S:
        input_ids = jnp.pad(input_ids, ((0, 0), (0, S_pad - S)))   # pad id 0 (valid row)
        poslang = jnp.pad(poslang, ((0, S_pad - S), (0, 0)))

    # Word gather hoisted to XLA: one batched lookup, (B, S_pad, H).
    word = jnp.take(word_table, input_ids.astype(jnp.int32), axis=0)

    gamma2d = gamma.reshape(1, H).astype(jnp.float32)
    beta2d = beta.reshape(1, H).astype(jnp.float32)

    grid = (B, S_pad // TB)

    out = pl.pallas_call(
        functools.partial(_palm_ln_kernel, eps=eps),
        out_shape=jax.ShapeDtypeStruct((B, S_pad, H), jnp.float32),
        grid=grid,
        in_specs=[
            # (batch, seq-tile) block of word embeddings; batch dim squeezed.
            pl.BlockSpec((None, TB, H), lambda b, j: (b, j, 0)),
            # matching seq-tile of the precomputed pos+lang table.
            pl.BlockSpec((TB, H), lambda b, j: (j, 0)),
            # LayerNorm params: single full-array block, constant index map.
            pl.BlockSpec((1, H), lambda b, j: (0, 0)),
            pl.BlockSpec((1, H), lambda b, j: (0, 0)),
        ],
        out_specs=pl.BlockSpec((None, TB, H), lambda b, j: (b, j, 0)),
        compiler_params=pltpu.CompilerParams(
            dimension_semantics=("parallel", "parallel")),
    )(word, poslang, gamma2d, beta2d)

    return out[:, :S, :]


# ---------------------------------------------------------------------------
# Pure-JAX reference (mirrors the PyTorch forward) for a correctness check.
# ---------------------------------------------------------------------------
def palm_embeddings_ref(input_ids, word_table, pos_table, lang_table,
                        gamma, beta, *, fixed_source_length, eps=1e-12):
    if input_ids.ndim == 1:
        input_ids = input_ids[None, :]
    B, S = input_ids.shape
    pos_ids = jnp.arange(S, dtype=jnp.int32)
    lang_ids = jnp.zeros((B, S), dtype=jnp.int32)
    if S > fixed_source_length:
        pos_ids = pos_ids.at[fixed_source_length:].set(
            jnp.arange(S - fixed_source_length, dtype=jnp.int32))
        lang_ids = lang_ids.at[:, fixed_source_length:].set(1)
    w = word_table[input_ids]
    p = pos_table[pos_ids][None, :, :]
    l = lang_table[lang_ids]
    x = w + p + l
    mean = jnp.mean(x, axis=-1, keepdims=True)
    var = jnp.mean((x - mean) ** 2, axis=-1, keepdims=True)
    y = (x - mean) * jax.lax.rsqrt(var + eps)
    return y * gamma + beta


if __name__ == "__main__":
    # Small "config" consistent with the module's __init__.
    vocab_size = 64
    hidden_size = 128          # multiple of 128 -> lane-dense stores
    max_position_embeddings = 16
    pad_token_id = 0
    fixed_source_length = 5
    layer_norm_eps = 1e-12

    batch, seq = 2, 12         # seq not a multiple of 8 -> exercises padding path

    key = jax.random.PRNGKey(0)
    k_w, k_p, k_l, k_ids = jax.random.split(key, 4)

    word_table = 0.02 * jax.random.normal(k_w, (vocab_size, hidden_size),
                                          dtype=jnp.float32)
    # padding_idx behaviour of nn.Embedding: pad row is zeroed at init.
    word_table = word_table.at[pad_token_id].set(0.0)
    pos_table = 0.02 * jax.random.normal(k_p, (max_position_embeddings,
                                               hidden_size), dtype=jnp.float32)
    lang_table = 0.02 * jax.random.normal(k_l, (2, hidden_size),
                                          dtype=jnp.float32)
    gamma = jnp.ones((hidden_size,), dtype=jnp.float32)
    beta = jnp.zeros((hidden_size,), dtype=jnp.float32)

    input_ids = jax.random.randint(k_ids, (batch, seq), 0, vocab_size,
                                   dtype=jnp.int32)

    out = palm_embeddings(input_ids, word_table, pos_table, lang_table,
                          gamma, beta,
                          fixed_source_length=fixed_source_length,
                          eps=layer_norm_eps)
    out = jax.block_until_ready(out)

    ref = palm_embeddings_ref(input_ids, word_table, pos_table, lang_table,
                              gamma, beta,
                              fixed_source_length=fixed_source_length,
                              eps=layer_norm_eps)

    assert out.shape == (batch, seq, hidden_size)
    assert jnp.allclose(out, ref, atol=1e-5, rtol=1e-5)
    print("KERNEL_OK")
</pallas_src>

<mosaic_0001>
module attributes {stable_mosaic.version = 11 : i64} {
  func.func @_palm_ln_kernel(%arg0: i32, %arg1: i32, %arg2: memref<1x16x128xf32, #tpu.memory_space<vmem>>, %arg3: memref<16x128xf32, #tpu.memory_space<vmem>>, %arg4: memref<1x128xf32, #tpu.memory_space<vmem>>, %arg5: memref<1x128xf32, #tpu.memory_space<vmem>>, %arg6: memref<1x16x128xf32, #tpu.memory_space<vmem>>) attributes {dimension_semantics = [#tpu.dimension_semantics<parallel>, #tpu.dimension_semantics<parallel>], iteration_bounds = array<i64: 2, 1>, scalar_prefetch = 0 : i64, scratch_operands = 0 : i64, tpu.core_type = #tpu.core_type<tc>, window_params = [{transform_indices = @transform_0, window_bounds = array<i64: 1, 16, 128>}, {transform_indices = @transform_1, window_bounds = array<i64: 16, 128>}, {pipeline_mode = #tpu.pipeline_mode<synchronous>, transform_indices = @transform_2, window_bounds = array<i64: 1, 128>}, {pipeline_mode = #tpu.pipeline_mode<synchronous>, transform_indices = @transform_3, window_bounds = array<i64: 1, 128>}, {transform_indices = @transform_4, window_bounds = array<i64: 1, 16, 128>}]} {
    %c0 = arith.constant 0 : index
    %c0_0 = arith.constant 0 : index
    %c0_1 = arith.constant 0 : index
    %0 = vector.load %arg2[%c0, %c0_0, %c0_1] : memref<1x16x128xf32, #tpu.memory_space<vmem>>, vector<1x16x128xf32>
    %1 = vector.shape_cast %0 : vector<1x16x128xf32> to vector<16x128xf32>
    %c0_2 = arith.constant 0 : index
    %c0_3 = arith.constant 0 : index
    %2 = vector.load %arg3[%c0_2, %c0_3] : memref<16x128xf32, #tpu.memory_space<vmem>>, vector<16x128xf32>
    %3 = arith.addf %1, %2 : vector<16x128xf32>
    %cst = arith.constant dense<0.000000e+00> : vector<16xf32>
    %4 = vector.multi_reduction <add>, %3, %cst [1] : vector<16x128xf32> to vector<16xf32>
    %5 = vector.shape_cast %4 : vector<16xf32> to vector<16x1xf32>
    %cst_4 = arith.constant 1.280000e+02 : f32
    %6 = vector.broadcast %cst_4 : f32 to vector<16x1xf32>
    %7 = arith.divf %5, %6 : vector<16x1xf32>
    %8 = vector.broadcast %7 : vector<16x1xf32> to vector<16x128xf32>
    %9 = arith.subf %3, %8 : vector<16x128xf32>
    %10 = arith.mulf %9, %9 : vector<16x128xf32>
    %cst_5 = arith.constant dense<0.000000e+00> : vector<16xf32>
    %11 = vector.multi_reduction <add>, %10, %cst_5 [1] : vector<16x128xf32> to vector<16xf32>
    %12 = vector.shape_cast %11 : vector<16xf32> to vector<16x1xf32>
    %cst_6 = arith.constant 1.280000e+02 : f32
    %13 = vector.broadcast %cst_6 : f32 to vector<16x1xf32>
    %14 = arith.divf %12, %13 : vector<16x1xf32>
    %cst_7 = arith.constant 9.99999996E-13 : f32
    %15 = vector.broadcast %cst_7 : f32 to vector<16x1xf32>
    %16 = arith.addf %14, %15 : vector<16x1xf32>
    %17 = math.rsqrt %16 : vector<16x1xf32>
    %18 = vector.broadcast %17 : vector<16x1xf32> to vector<16x128xf32>
    %19 = arith.mulf %9, %18 : vector<16x128xf32>
    %c0_8 = arith.constant 0 : index
    %c0_9 = arith.constant 0 : index
    %20 = vector.load %arg4[%c0_8, %c0_9] : memref<1x128xf32, #tpu.memory_space<vmem>>, vector<1x128xf32>
    %21 = vector.broadcast %20 : vector<1x128xf32> to vector<16x128xf32>
    %22 = arith.mulf %19, %21 : vector<16x128xf32>
    %c0_10 = arith.constant 0 : index
    %c0_11 = arith.constant 0 : index
    %23 = vector.load %arg5[%c0_10, %c0_11] : memref<1x128xf32, #tpu.memory_space<vmem>>, vector<1x128xf32>
    %24 = vector.broadcast %23 : vector<1x128xf32> to vector<16x128xf32>
    %25 = arith.addf %22, %24 : vector<16x128xf32>
    %c0_12 = arith.constant 0 : index
    %c0_13 = arith.constant 0 : index
    %c0_14 = arith.constant 0 : index
    %26 = vector.load %arg6[%c0_12, %c0_13, %c0_14] : memref<1x16x128xf32, #tpu.memory_space<vmem>>, vector<1x16x128xf32>
    %27 = vector.shape_cast %26 : vector<1x16x128xf32> to vector<16x128xf32>
    %28 = vector.shape_cast %25 : vector<16x128xf32> to vector<1x16x128xf32>
    tpu.vector_store %arg6[%c0_12, %c0_13, %c0_14], %28 {strides = array<i32>} : memref<1x16x128xf32, #tpu.memory_space<vmem>>, vector<1x16x128xf32>,
    return
  }
  func.func @transform_0(%arg0: i32, %arg1: i32) -> (i32, i32, i32) {
    %c0_i32 = arith.constant 0 : i32
    %c0_i32_0 = arith.constant 0 : i32
    return %arg0, %arg1, %c0_i32 : i32, i32, i32
  }
  func.func @transform_1(%arg0: i32, %arg1: i32) -> (i32, i32) {
    %c0_i32 = arith.constant 0 : i32
    %c0_i32_0 = arith.constant 0 : i32
    return %arg1, %c0_i32 : i32, i32
  }
  func.func @transform_2(%arg0: i32, %arg1: i32) -> (i32, i32) {
    %c0_i32 = arith.constant 0 : i32
    %c0_i32_0 = arith.constant 0 : i32
    %c0_i32_1 = arith.constant 0 : i32
    return %c0_i32, %c0_i32_0 : i32, i32
  }
  func.func @transform_3(%arg0: i32, %arg1: i32) -> (i32, i32) {
    %c0_i32 = arith.constant 0 : i32
    %c0_i32_0 = arith.constant 0 : i32
    %c0_i32_1 = arith.constant 0 : i32
    return %c0_i32, %c0_i32_0 : i32, i32
  }
  func.func @transform_4(%arg0: i32, %arg1: i32) -> (i32, i32, i32) {
    %c0_i32 = arith.constant 0 : i32
    %c0_i32_0 = arith.constant 0 : i32
    return %arg0, %arg1, %c0_i32 : i32, i32, i32
  }
}

</mosaic_0001>

<llo_original>
// kernel: tpu_custom_call.1
$region0: #{tpu_custom_call.1}
  #allocation0 [shape = 'u32[]', space=smem, size = 0x4, offset = 0x4, fixed_abs, tag = 'smem constant byte address 0x4 - core index']
  #allocation1 [shape = 'u32[144,128]{1,0:T(1,128)}', space=vmem, size = 0x12000, scoped, tag = 'internal scratch']
  %s0 = inlined_call_operand.hbm [shape: f32[2,16,128], index: 0, kind: input, shape index: {}]
  %s1 = inlined_call_operand.hbm [shape: f32[16,128], index: 1, kind: input, shape index: {}]
  %s2 = inlined_call_operand.vmem [shape: f32[1,128], index: 2, kind: input, shape index: {}]
  %s3 = inlined_call_operand.vmem [shape: f32[1,128], index: 3, kind: input, shape index: {}]
  %s4 = inlined_call_operand.hbm [shape: f32[2,16,128], index: 4, kind: output, shape index: {}]
  %s5 = sld [smem:[#allocation0]]
  $region57: #{tpu_custom_call.1} parent=0
    _
  %s7 = ssub.s32 1, %s5
  %s8 = scalar_select 0, %s7, %s5
  $region1: #{tpu_custom_call.1} parent=0
    #allocation2 [shape = 'u8[16384]{0}', space=vmem, size = 0x4000, scoped, tag = 'input window, operand 0']
    #allocation3 [shape = 's32[2]{0}', space=sflag, size = 0x8, scoped, tag = 'scoped memory for tpu_custom_call.1']
    #allocation4 [shape = 's32[2]{0}', space=sflag, size = 0x8, scoped, tag = 'scoped memory for tpu_custom_call.1']
    #allocation5 [shape = 'u8[8192]{0}', space=vmem, size = 0x2000, scoped, tag = 'input window, operand 1, single buffered']
    #allocation6 [shape = 's32[1]{0}', space=sflag, size = 0x4, scoped, tag = 'scoped memory for tpu_custom_call.1']
    #allocation7 [shape = 'u8[16384]{0}', space=vmem, size = 0x4000, scoped, tag = 'output window, operand 0']
    %9 = vsyncpa [#allocation3], 0
    %s10 = scalar_lea.sflag [#allocation3], 1
    %11 = vsyncpa %s10, 0
    %12 = vsyncpa [#allocation6], 0
    %13 = vsyncpa [#allocation4], 0
    %s14 = scalar_lea.sflag [#allocation4], 1
    %15 = vsyncpa %s14, 0
    loop: start=0, step=1, limit=4
    $region2: #{tpu_custom_call.1} parent=1 // loop_pre_header
      _
    $region3: #{tpu_custom_call.1} parent=1 // loop_header
      %s17 = sphi 0, %s21
      %p18 = scmp.ge.s32.totalorder %s17, 4
      %s24 = sphi 0, %s36
      %s25 = sphi 0, %s32
      %s26 = sphi 0, %s24
      %s27 = sphi 0, %s25
      %s28 = sphi 0, %s26
      %s29 = sphi 0, %s27
      %s41 = sphi 0, %s43
      %s44 = sphi 0, %s41
      %s45 = sphi 0, %s44
      %s61 = sphi 0, %s45
      %s67 = sphi 0, %s69
      %s70 = sphi 0, %s67
      %s71 = sphi 0, %s70
      %s87 = sphi 0, %s71
      %s91 = sphi 0, %s91
      %s93 = sphi 0, %s91
      %s94 = sphi 0, %s93
      %s108 = sphi 0, %s94
      %s112 = sphi 0, %s112
      %s114 = sphi 0, %s112
      %s115 = sphi 0, %s114
      %s129 = sphi 0, %s115
      %s137 = sphi 0, %s139
      %s140 = sphi 0, %s137
      %s141 = sphi 0, %s140
      %s157 = sphi 0, %s141
    $region4: #{tpu_custom_call.1} parent=1 // loop_header_branch
      %20 = sbr.rel (%p18) target = $region8
    $region5: #{tpu_custom_call.1} parent=1 // loop_body
      %s22 = ssub.s32 %s17, 1
      %s23 = ssub.s32 %s17, 2
      %s30 = sadd.s32 1, %s25
      %p31 = scmp.ge.s32.totalorder %s30, 1
      %s32 = scalar_select %p31, 0, %s30
      %s33 = sadd.s32 1, %s24
      %s34 = scalar_select %p31, %s33, %s24
      %p35 = scmp.ge.s32.totalorder %s34, 2
      %s36 = scalar_select %p35, 0, %s34
      %s37 = ssub.s32 %s24, %s36
      %s38 = ssub.s32 %s25, %s32
      %s39 = sor.u32 %s37, %s38
      %p40 = scmp.eq.s32.totalorder %s39, 0
      %s42 = sadd.s32 %s41, 1
      %s43 = scalar_select %p40, %s41, %s42
      %p46 = pneg %p40
      %p47 = scmp.eq.s32.totalorder %s17, 1
      %p48 = por %p46, %p47
      %p49 = scmp.ne.s32.totalorder %s41, %s44
      %p50 = scmp.eq.s32.totalorder %s17, 0
      %p51 = por %p49, %p50
      %p52 = scmp.ne.s32.totalorder %s41, %s44
      %p53 = scmp.eq.s32.totalorder %s22, 1
      %p54 = por %p52, %p53
      %p55 = scmp.ne.s32.totalorder %s44, %s45
      %p56 = scmp.eq.s32.totalorder %s22, 0
      %p57 = por %p55, %p56
      %p58 = scmp.ne.s32.totalorder %s44, %s45
      %p59 = scmp.eq.s32.totalorder %s23, 1
      %p60 = por %p58, %p59
      %p62 = scmp.ne.s32.totalorder %s45, %s61
      %p63 = scmp.eq.s32.totalorder %s23, 0
      %p64 = por %p62, %p63
      %s65 = ssub.s32 %s25, %s32
      %p66 = scmp.eq.s32.totalorder %s65, 0
      %s68 = sadd.s32 %s67, 1
      %s69 = scalar_select %p66, %s67, %s68
      %p72 = pneg %p66
      %p73 = scmp.eq.s32.totalorder %s17, 1
      %p74 = por %p72, %p73
      %p75 = scmp.ne.s32.totalorder %s67, %s70
      %p76 = scmp.eq.s32.totalorder %s17, 0
      %p77 = por %p75, %p76
      %p78 = scmp.ne.s32.totalorder %s67, %s70
      %p79 = scmp.eq.s32.totalorder %s22, 1
      %p80 = por %p78, %p79
      %p81 = scmp.ne.s32.totalorder %s70, %s71
      %p82 = scmp.eq.s32.totalorder %s22, 0
      %p83 = por %p81, %p82
      %p84 = scmp.ne.s32.totalorder %s70, %s71
      %p85 = scmp.eq.s32.totalorder %s23, 1
      %p86 = por %p84, %p85
      %p88 = scmp.ne.s32.totalorder %s71, %s87
      %p89 = scmp.eq.s32.totalorder %s23, 0
      %p90 = por %p88, %p89
      %s92 = sadd.s32 %s91, 1
      %p95 = scmp.eq.s32.totalorder %s17, 1
      %p96 = scmp.ne.s32.totalorder %s91, %s93
      %p97 = scmp.eq.s32.totalorder %s17, 0
      %p98 = por %p96, %p97
      %p99 = scmp.ne.s32.totalorder %s91, %s93
      %p100 = scmp.eq.s32.totalorder %s22, 1
      %p101 = por %p99, %p100
      %p102 = scmp.ne.s32.totalorder %s93, %s94
      %p103 = scmp.eq.s32.totalorder %s22, 0
      %p104 = por %p102, %p103
      %p105 = scmp.ne.s32.totalorder %s93, %s94
      %p106 = scmp.eq.s32.totalorder %s23, 1
      %p107 = por %p105, %p106
      %p109 = scmp.ne.s32.totalorder %s94, %s108
      %p110 = scmp.eq.s32.totalorder %s23, 0
      %p111 = por %p109, %p110
      %s113 = sadd.s32 %s112, 1
      %p116 = scmp.eq.s32.totalorder %s17, 1
      %p117 = scmp.ne.s32.totalorder %s112, %s114
      %p118 = scmp.eq.s32.totalorder %s17, 0
      %p119 = por %p117, %p118
      %p120 = scmp.ne.s32.totalorder %s112, %s114
      %p121 = scmp.eq.s32.totalorder %s22, 1
      %p122 = por %p120, %p121
      %p123 = scmp.ne.s32.totalorder %s114, %s115
      %p124 = scmp.eq.s32.totalorder %s22, 0
      %p125 = por %p123, %p124
      %p126 = scmp.ne.s32.totalorder %s114, %s115
      %p127 = scmp.eq.s32.totalorder %s23, 1
      %p128 = por %p126, %p127
      %p130 = scmp.ne.s32.totalorder %s115, %s129
      %p131 = scmp.eq.s32.totalorder %s23, 0
      %p132 = por %p130, %p131
      %s133 = ssub.s32 %s24, %s36
      %s134 = ssub.s32 %s25, %s32
      %s135 = sor.u32 %s133, %s134
      %p136 = scmp.eq.s32.totalorder %s135, 0
      %s138 = sadd.s32 %s137, 1
      %s139 = scalar_select %p136, %s137, %s138
      %p142 = pneg %p136
      %p143 = scmp.eq.s32.totalorder %s17, 1
      %p144 = por %p142, %p143
      %p145 = scmp.ne.s32.totalorder %s137, %s140
      %p146 = scmp.eq.s32.totalorder %s17, 0
      %p147 = por %p145, %p146
      %p148 = scmp.ne.s32.totalorder %s137, %s140
      %p149 = scmp.eq.s32.totalorder %s22, 1
      %p150 = por %p148, %p149
      %p151 = scmp.ne.s32.totalorder %s140, %s141
      %p152 = scmp.eq.s32.totalorder %s22, 0
      %p153 = por %p151, %p152
      %p154 = scmp.ne.s32.totalorder %s140, %s141
      %p155 = scmp.eq.s32.totalorder %s23, 1
      %p156 = por %p154, %p155
      %p158 = scmp.ne.s32.totalorder %s141, %s157
      %p159 = scmp.eq.s32.totalorder %s23, 0
      %p160 = por %p158, %p159
      %p161 = scmp.le.s32.totalorder 1, %s17
      %p162 = scmp.lt.s32.totalorder %s17, 3
      %p163 = pnand %p161, %p162
      %p164 = pneg %p163
      // Predicated region
      $region9: #{tpu_custom_call.1} parent=5 // pred_check
        _
      $region10: #{tpu_custom_call.1} parent=5 // pred_check_branch
        %166 = sbr.rel (%p163) target = $region12
      $region11: #{tpu_custom_call.1} parent=5 // pred_region
        %s167 = ssub.s32 %s17, 1
        // Predicated region
        $region13: #{tpu_custom_call.1} parent=11 // pred_check
          %p168 = pneg %p83
        $region14: #{tpu_custom_call.1} parent=11 // pred_check_branch
          %170 = sbr.rel (%p168) target = $region16
        $region15: #{tpu_custom_call.1} parent=11 // pred_region
          %s171 = smul.u32 2, %s27
          %s173 = ssub.s32 256, 256
          %174 = vsyncadd [#allocation6], %s173
          %s175 = smul.addr %s171, 128
          %s176 = scalar_lea.hbm %s1, %s175
          %s177 = sshll.u32 [#allocation5], 4
          %s178 = int_to_ptr.vmem [resolvable:$true] %s177
          %183 = dma.hbm_to_vmem [thread:$0]  %s176, 256, %s178, [#allocation6], 128, 128, 8
        $region16: #{tpu_custom_call.1} parent=11 // pred_fallthru
          _
        // Predicated region
        $region17: #{tpu_custom_call.1} parent=11 // pred_check
          %p184 = pneg %p104
        $region18: #{tpu_custom_call.1} parent=11 // pred_check_branch
          %186 = sbr.rel (%p184) target = $region20
        $region19: #{tpu_custom_call.1} parent=11 // pred_region
          _
        $region20: #{tpu_custom_call.1} parent=11 // pred_fallthru
          _
        // Predicated region
        $region21: #{tpu_custom_call.1} parent=11 // pred_check
          %p187 = pneg %p125
        $region22: #{tpu_custom_call.1} parent=11 // pred_check_branch
          %189 = sbr.rel (%p187) target = $region24
        $region23: #{tpu_custom_call.1} parent=11 // pred_region
          _
        $region24: #{tpu_custom_call.1} parent=11 // pred_fallthru
          _
      $region12: #{tpu_custom_call.1} parent=5 // pred_fallthru
        _
      %p190 = scmp.lt.s32.totalorder %s17, 2
      // Predicated region
      $region25: #{tpu_custom_call.1} parent=5 // pred_check
        %p191 = pneg %p190
      $region26: #{tpu_custom_call.1} parent=5 // pred_check_branch
        %193 = sbr.rel (%p191) target = $region28
      $region27: #{tpu_custom_call.1} parent=5 // pred_region
        // Predicated region
        $region29: #{tpu_custom_call.1} parent=27 // pred_check
          %p194 = pneg %p51
        $region30: #{tpu_custom_call.1} parent=27 // pred_check_branch
          %196 = sbr.rel (%p194) target = $region32
        $region31: #{tpu_custom_call.1} parent=27 // pred_region
          %s197 = sand.u32 %s41, 1
          %s198 = scalar_lea.sflag [#allocation3], %s197
          %s199 = sand.u32 %s41, 1
          %s200 = smul.addr %s199, 16
          %s201 = scalar_lea.vmem [#allocation2], %s200
          %s202 = smul.u32 2, %s25
          %s204 = ssub.s32 256, 256
          %205 = vsyncadd %s198, %s204
          %s206 = smul.addr %s24, 2
          %s207 = sadd.s32 %s202, %s206
          %s208 = smul.addr %s207, 128
          %s209 = scalar_lea.hbm %s0, %s208
          %s210 = sshll.u32 %s201, 4
          %s211 = int_to_ptr.vmem [resolvable:$true] %s210
          %216 = dma.hbm_to_vmem [thread:$0]  %s209, 256, %s211, %s198, 128, 128, 8
        $region32: #{tpu_custom_call.1} parent=27 // pred_fallthru
          _
      $region28: #{tpu_custom_call.1} parent=5 // pred_fallthru
        _
      %p217 = scmp.le.s32.totalorder 1, %s17
      %p218 = scmp.lt.s32.totalorder %s17, 3
      %p219 = pnand %p217, %p218
      %p220 = pneg %p219
      // Predicated region
      $region33: #{tpu_custom_call.1} parent=5 // pred_check
        _
      $region34: #{tpu_custom_call.1} parent=5 // pred_check_branch
        %222 = sbr.rel (%p219) target = $region36
      $region35: #{tpu_custom_call.1} parent=5 // pred_region
        %s223 = ssub.s32 %s17, 1
        %s224 = sand.u32 %s44, 1
        %s225 = scalar_lea.sflag [#allocation3], %s224
        %s226 = sand.u32 %s44, 1
        %s227 = smul.addr %s226, 16
        %s228 = scalar_lea.vmem [#allocation2], %s227
        // Predicated region
        $region37: #{tpu_custom_call.1} parent=35 // pred_check
          %p229 = pneg %p57
        $region38: #{tpu_custom_call.1} parent=35 // pred_check_branch
          %231 = sbr.rel (%p229) target = $region40
        $region39: #{tpu_custom_call.1} parent=35 // pred_region
          %232 = dma.done %s225, 256
        $region40: #{tpu_custom_call.1} parent=35 // pred_fallthru
          _
        // Predicated region
        $region41: #{tpu_custom_call.1} parent=35 // pred_check
          %p233 = pneg %p83
        $region42: #{tpu_custom_call.1} parent=35 // pred_check_branch
          %235 = sbr.rel (%p233) target = $region44
        $region43: #{tpu_custom_call.1} parent=35 // pred_region
          %236 = dma.done [#allocation6], 256
        $region44: #{tpu_custom_call.1} parent=35 // pred_fallthru
          _
        %s237 = sand.u32 %s44, 1
        %s238 = scalar_lea.sflag [#allocation3], %s237
        %s239 = sand.u32 %s44, 1
        %s240 = smul.addr %s239, 16
        %s241 = scalar_lea.vmem [#allocation2], %s240
        %p242 = pneg %p57
        %p243 = pneg %p54
        %p244 = pneg %p83
        %p245 = pneg %p80
        %p246 = pneg %p104
        %p247 = pneg %p101
        %p248 = pneg %p125
        %p249 = pneg %p122
        %p250 = pneg %p153
        %p251 = pneg %p150
        %s252 = sand.u32 %s140, 1
        %s253 = scalar_lea.sflag [#allocation4], %s252
        %s254 = sand.u32 %s140, 1
        %s255 = smul.addr %s254, 16
        %s256 = scalar_lea.vmem [#allocation7], %s255
        %s257 = smul.u32 2, %s27
        %s258 = smul.u32 2, %s27
        %s259 = smul.u32 2, %s27
        %v260 = vld [vmem:[%s228] sm:$0xff]
        %v261 = vld [vmem:[%s228 + $0x8] sm:$0xff]
        %v262 = vld [vmem:[#allocation5] sm:$0xff]
        %v263 = vld [vmem:[#allocation5 + $0x8] sm:$0xff]
        %v264 = vadd.f32 %v260, %v262
        %v265 = vadd.f32 %v261, %v263
        %266 = vadd.xlane.f32.xlu0 %v264
        %v267 = vpop.xlane.xlu0 %266
        %268 = vadd.xlane.f32.xlu0 %v265
        %v269 = vpop.xlane.xlu0 %268
        %v270 = vrcp.pop 128.0
        %v271 = vmul.f32 %v267, %v270
        %v272 = vmul.f32 %v269, %v270
        %v273 = vsub.f32 %v264, %v271
        %v274 = vsub.f32 %v265, %v272
        %v275 = vmul.f32 %v273, %v273
        %v276 = vmul.f32 %v274, %v274
        %277 = vadd.xlane.f32.xlu0 %v275
        %v278 = vpop.xlane.xlu0 %277
        %279 = vadd.xlane.f32.xlu0 %v276
        %v280 = vpop.xlane.xlu0 %279
        %v281 = vmul.f32 %v278, %v270
        %v282 = vmul.f32 %v280, %v270
        %v283 = vadd.f32 %v281, 1e-12
        %v284 = vadd.f32 %v282, 1e-12
        %v285 = vrsqrt.pop %v283
        %v286 = vrsqrt.pop %v284
        %v287 = vmul.f32 %v273, %v285
        %v288 = vmul.f32 %v274, %v286
        %v289 = vld [vmem:[%s2] sm:$0x1]
        %v291 = vlaneseq
        %v292 = vshrl.u32 %v291, 7
        %v293 = vsub.s32 0, %v292
        %v294 = vrot.slane %v289, %v293
        %v296 = vmul.f32 %v287, %v294
        %v297 = vmul.f32 %v288, %v294
        %v298 = vld [vmem:[%s3] sm:$0x1]
        %v300 = vlaneseq
        %v301 = vshrl.u32 %v300, 7
        %v302 = vsub.s32 0, %v301
        %v303 = vrot.slane %v298, %v302
        %v305 = vadd.f32 %v296, %v303
        %v306 = vadd.f32 %v297, %v303
        %307 = vst [vmem:[%s256] sm:$0xff] %v305
        %308 = vst [vmem:[%s256 + $0x8] sm:$0xff] %v306
        %s309 = sand.u32 %s140, 1
        %s310 = scalar_lea.sflag [#allocation4], %s309
        %s311 = sand.u32 %s140, 1
        %s312 = smul.addr %s311, 16
        %s313 = scalar_lea.vmem [#allocation7], %s312
        // Predicated region
        $region45: #{tpu_custom_call.1} parent=35 // pred_check
          %p314 = pneg %p150
        $region46: #{tpu_custom_call.1} parent=35 // pred_check_branch
          %316 = sbr.rel (%p314) target = $region48
        $region47: #{tpu_custom_call.1} parent=35 // pred_region
          %s317 = smul.u32 2, %s27
          %s319 = ssub.s32 256, 256
          %320 = vsyncadd %s310, %s319
          %s321 = smul.addr %s26, 2
          %s322 = sadd.s32 %s317, %s321
          %s323 = smul.addr %s322, 128
          %s324 = scalar_lea.hbm %s4, %s323
          %s325 = sshll.u32 %s313, 4
          %s326 = int_to_ptr.vmem [resolvable:$true] %s325
          %331 = dma.vmem_to_hbm [thread:$0]  %s326, 256, %s324, %s310, 128, 128, 8
        $region48: #{tpu_custom_call.1} parent=35 // pred_fallthru
          _
      $region36: #{tpu_custom_call.1} parent=5 // pred_fallthru
        _
      %p332 = scmp.le.s32.totalorder 2, %s17
      // Predicated region
      $region49: #{tpu_custom_call.1} parent=5 // pred_check
        %p333 = pneg %p332
      $region50: #{tpu_custom_call.1} parent=5 // pred_check_branch
        %335 = sbr.rel (%p333) target = $region52
      $region51: #{tpu_custom_call.1} parent=5 // pred_region
        %s336 = ssub.s32 %s17, 2
        // Predicated region
        $region53: #{tpu_custom_call.1} parent=51 // pred_check
          %p337 = pneg %p156
        $region54: #{tpu_custom_call.1} parent=51 // pred_check_branch
          %339 = sbr.rel (%p337) target = $region56
        $region55: #{tpu_custom_call.1} parent=51 // pred_region
          %s340 = sand.u32 %s141, 1
          %s341 = scalar_lea.sflag [#allocation4], %s340
          %s342 = sand.u32 %s141, 1
          %s343 = smul.addr %s342, 16
          %s344 = scalar_lea.vmem [#allocation7], %s343
          %345 = dma.done %s341, 256
        $region56: #{tpu_custom_call.1} parent=51 // pred_fallthru
          _
      $region52: #{tpu_custom_call.1} parent=5 // pred_fallthru
        _
    $region6: #{tpu_custom_call.1} parent=1 // loop_footer
      %s21 = sadd.s32 1, %s17
    $region7: #{tpu_custom_call.1} parent=1 // loop_footer_branch
      %16 = sbr.rel target = $region3
    $region8: #{tpu_custom_call.1} parent=1 // loop_exit
      _
    %346 = vsyncpa [#allocation3], 1
    %s347 = scalar_lea.sflag [#allocation3], 1
    %348 = vsyncpa %s347, 1
    %349 = vsyncpa [#allocation6], 1
    %350 = vsyncpa [#allocation4], 1
    %s351 = scalar_lea.sflag [#allocation4], 1
    %352 = vsyncpa %s351, 1

</llo_original>
